<compile_context>
chip_gen: v6e
topology: v6e:2x2x1
jax: 0.10.0
libtpu: 0.0.40
codegen_flags: <defaults>
</compile_context>

<pallas_src>
import jax
import jax.numpy as jnp
from jax.experimental import pallas as pl
from jax.experimental.pallas import tpu as pltpu


def _round_up(x, m):
    return (x + m - 1) // m * m


def _pick_tile(hw, max_tile=512):
    """Largest tile <= max_tile that divides hw and is a multiple of 128."""
    if hw % 128 != 0:
        # Full-extent block is still legal; stores become masked (perf note).
        return hw
    t = min(max_tile, hw)
    while hw % t != 0:
        t //= 2
    return max(t, 128)


# ---------------------------------------------------------------------------
# Fused PAM kernel, one (batch, query-tile, key-tile) grid step per call.
#   xq_ref : (1, C, Tq)   query columns of x           (f32)
#   xk_ref : (1, C, Tk)   key/value columns of x       (f32)
#   wq_ref : (C8p, C)     query 1x1-conv weight        (bf16, zero-padded rows)
#   bq_ref : (C8p, 1)     query bias                   (f32)
#   wkv_ref: (C8p+C, C)   stacked [Wk; Wv]             (bf16)
#   bkv_ref: (C8p+C, 1)   stacked [bk; bv]             (f32)
#   gamma  : (1,) scalar in SMEM
#   o_ref  : (1, C, Tq)   output tile
# Scratch: m (1,Tq), l (1,Tq), acc (C,Tq) f32; q cache (C8p,Tq) bf16.
# ---------------------------------------------------------------------------
def _pam_kernel(xq_ref, xk_ref, wq_ref, bq_ref, wkv_ref, bkv_ref, gamma_ref,
                o_ref, m_scr, l_scr, acc_scr, q_scr):
    c8p = wq_ref.shape[0]
    ki = pl.program_id(2)

    @pl.when(ki == 0)
    def _init():
        m_scr[...] = jnp.full_like(m_scr, -jnp.inf)
        l_scr[...] = jnp.zeros_like(l_scr)
        acc_scr[...] = jnp.zeros_like(acc_scr)
        # Query projection for this query tile, computed once and cached (bf16).
        q = jnp.dot(wq_ref[...], xq_ref[0].astype(jnp.bfloat16),
                    preferred_element_type=jnp.float32) + bq_ref[...]
        q_scr[...] = q.astype(jnp.bfloat16)

    # One stacked channel-mixing matmul produces both k and v for this key tile.
    xkb = xk_ref[0].astype(jnp.bfloat16)                       # (C, Tk)
    kv = jnp.dot(wkv_ref[...], xkb,
                 preferred_element_type=jnp.float32) + bkv_ref[...]
    k = kv[:c8p, :].astype(jnp.bfloat16)                       # (C8p, Tk)
    v = kv[c8p:, :].astype(jnp.bfloat16)                       # (C,   Tk)

    # energy[j, i] = <k[:, j], q[:, i]>  -> (Tk, Tq); contract channel axis 0
    # directly (no explicit q.T / k.T materialization).
    e = jax.lax.dot_general(
        k, q_scr[...],
        dimension_numbers=(((0,), (0,)), ((), ())),
        preferred_element_type=jnp.float32)                    # (Tk, Tq)

    # Online softmax over the key axis (axis 0), deferred normalization.
    m_prev = m_scr[...]                                        # (1, Tq)
    m_new = jnp.maximum(m_prev, jnp.max(e, axis=0, keepdims=True))
    alpha = jnp.exp(m_prev - m_new)                            # (1, Tq)
    p = jnp.exp(e - m_new)                                     # (Tk, Tq) f32
    l_scr[...] = alpha * l_scr[...] + jnp.sum(p, axis=0, keepdims=True)
    acc_scr[...] = alpha * acc_scr[...] + jnp.dot(
        v, p.astype(jnp.bfloat16), preferred_element_type=jnp.float32)  # (C, Tq)
    m_scr[...] = m_new

    @pl.when(ki == pl.num_programs(2) - 1)
    def _finalize():
        out = acc_scr[...] * pl.reciprocal(l_scr[...], approx=True)
        o_ref[0] = gamma_ref[0] * out + xq_ref[0]


def pam_module(x, params, *, tq=None, tk=None):
    """PAM_Module.forward.  x: (B, C, H, W) f32 -> (B, C, H, W) f32."""
    B, C, H, W = x.shape
    HW = H * W
    C8 = C // 8
    assert C8 >= 1, "in_dim must be >= 8 (as in the PyTorch module)"
    C8P = _round_up(C8, 8)          # pad q/k channel dim; zero rows are inert

    if tq is None:
        tq = _pick_tile(HW)
    if tk is None:
        tk = _pick_tile(HW)
    assert HW % tq == 0 and HW % tk == 0, (HW, tq, tk)
    assert tq == HW or tq % 128 == 0, tq
    assert tk == HW or tk % 128 == 0, tk
    nq, nk = HW // tq, HW // tk

    x3 = x.reshape(B, C, HW).astype(jnp.float32)    # NCHW-native, HW on lanes

    def pad_qk_w(w):                 # (C8, C, 1, 1) -> (C8P, C)
        return jnp.pad(w.reshape(C8, C), ((0, C8P - C8), (0, 0)))

    def pad_qk_b(b):                 # (C8,) -> (C8P, 1)
        return jnp.pad(b.reshape(C8), (0, C8P - C8)).reshape(C8P, 1)

    wq = pad_qk_w(params["wq"]).astype(jnp.bfloat16)
    bq = pad_qk_b(params["bq"]).astype(jnp.float32)
    wkv = jnp.concatenate(
        [pad_qk_w(params["wk"]), params["wv"].reshape(C, C)], axis=0
    ).astype(jnp.bfloat16)                                   # (C8P + C, C)
    bkv = jnp.concatenate(
        [pad_qk_b(params["bk"]), params["bv"].reshape(C, 1)], axis=0
    ).astype(jnp.float32)                                    # (C8P + C, 1)
    gamma = params["gamma"].reshape(1).astype(jnp.float32)

    const = lambda b, qi, ki: (0, 0)                         # VMEM-resident weights

    out = pl.pallas_call(
        _pam_kernel,
        out_shape=jax.ShapeDtypeStruct((B, C, HW), jnp.float32),
        grid_spec=pltpu.PrefetchScalarGridSpec(
            num_scalar_prefetch=0,
            grid=(B, nq, nk),
            in_specs=[
                pl.BlockSpec((1, C, tq), lambda b, qi, ki: (b, 0, qi)),   # x (query cols)
                pl.BlockSpec((1, C, tk), lambda b, qi, ki: (b, 0, ki)),   # x (key cols)
                pl.BlockSpec((C8P, C), const),                            # Wq
                pl.BlockSpec((C8P, 1), const),                            # bq
                pl.BlockSpec((C8P + C, C), const),                        # [Wk; Wv]
                pl.BlockSpec((C8P + C, 1), const),                        # [bk; bv]
                pl.BlockSpec(memory_space=pltpu.MemorySpace.SMEM),        # gamma
            ],
            out_specs=pl.BlockSpec((1, C, tq), lambda b, qi, ki: (b, 0, qi)),
            scratch_shapes=[
                pltpu.VMEM((1, tq), jnp.float32),       # running max m
                pltpu.VMEM((1, tq), jnp.float32),       # running denom l
                pltpu.VMEM((C, tq), jnp.float32),       # unnormalized accumulator
                pltpu.VMEM((C8P, tq), jnp.bfloat16),    # cached q tile
            ],
        ),
        # Per-step VMEM is a few MiB at Tq=Tk=512, well under the default
        # scoped limit on every generation, so no explicit vmem_limit_bytes.
        compiler_params=pltpu.CompilerParams(
            dimension_semantics=("parallel", "parallel", "arbitrary")),
    )(x3, x3, wq, bq, wkv, bkv, gamma)
    return out.reshape(B, C, H, W)


# ---------------------------------------------------------------------------
# Pure-JAX reference (mirrors the PyTorch forward) for a numerical sanity check.
# ---------------------------------------------------------------------------
def pam_reference(x, p):
    B, C, H, W = x.shape
    HW = H * W
    C8 = C // 8
    xf = x.reshape(B, C, HW).astype(jnp.float32)
    q = jnp.einsum('oc,bci->boi', p["wq"].reshape(C8, C), xf) + p["bq"].reshape(1, C8, 1)
    k = jnp.einsum('oc,bci->boi', p["wk"].reshape(C8, C), xf) + p["bk"].reshape(1, C8, 1)
    v = jnp.einsum('oc,bci->boi', p["wv"].reshape(C, C), xf) + p["bv"].reshape(1, C, 1)
    energy = jnp.einsum('bci,bcj->bij', q, k)            # (B, HW, HW)
    attn = jax.nn.softmax(energy, axis=-1)
    out = jnp.einsum('bcj,bij->bci', v, attn)            # (B, C, HW)
    out = p["gamma"].reshape(()) * out + xf
    return out.reshape(B, C, H, W)


if __name__ == "__main__":
    B, C, H, W = 2, 32, 16, 16
    C8 = C // 8
    key = jax.random.PRNGKey(0)
    kx, k1, k2, k3, k4, k5, k6 = jax.random.split(key, 7)
    params = {
        "wq": jax.random.normal(k1, (C8, C, 1, 1), jnp.float32) * 0.1,
        "bq": jax.random.normal(k2, (C8,), jnp.float32) * 0.05,
        "wk": jax.random.normal(k3, (C8, C, 1, 1), jnp.float32) * 0.1,
        "bk": jax.random.normal(k4, (C8,), jnp.float32) * 0.05,
        "wv": jax.random.normal(k5, (C, C, 1, 1), jnp.float32) * 0.1,
        "bv": jax.random.normal(k6, (C,), jnp.float32) * 0.05,
        # PyTorch initializes gamma to 0 (output == input); use a non-zero value
        # so the attention path is actually exercised.  Semantics are identical.
        "gamma": jnp.array([0.5], jnp.float32),
    }
    x = jax.random.normal(kx, (B, C, H, W), jnp.float32)

    # Tq = Tk = 128 with HW = 256 exercises the multi-step online-softmax
    # accumulation (grid = (2, 2, 2)).
    run = jax.jit(lambda xx: pam_module(xx, params, tq=128, tk=128))
    out = jax.block_until_ready(run(x))
    assert out.shape == (B, C, H, W), out.shape
    assert bool(jnp.all(jnp.isfinite(out)))

    ref = pam_reference(x, params)
    max_err = float(jnp.max(jnp.abs(out - ref)))
    assert max_err < 5e-2, f"max abs error vs reference too large: {max_err}"
    print("KERNEL_OK")
</pallas_src>

<mosaic_0001>
module attributes {stable_mosaic.version = 11 : i64} {
  func.func @_pam_kernel(%arg0: i32, %arg1: i32, %arg2: i32, %arg3: memref<1x32x128xf32, #tpu.memory_space<vmem>>, %arg4: memref<1x32x128xf32, #tpu.memory_space<vmem>>, %arg5: memref<8x32xbf16, #tpu.memory_space<vmem>>, %arg6: memref<8x1xf32, #tpu.memory_space<vmem>>, %arg7: memref<40x32xbf16, #tpu.memory_space<vmem>>, %arg8: memref<40x1xf32, #tpu.memory_space<vmem>>, %arg9: memref<1xf32, #tpu.memory_space<smem>>, %arg10: memref<1x32x128xf32, #tpu.memory_space<vmem>>, %arg11: memref<1x128xf32, #tpu.memory_space<vmem>>, %arg12: memref<1x128xf32, #tpu.memory_space<vmem>>, %arg13: memref<32x128xf32, #tpu.memory_space<vmem>>, %arg14: memref<8x128xbf16, #tpu.memory_space<vmem>>) attributes {dimension_semantics = [#tpu.dimension_semantics<parallel>, #tpu.dimension_semantics<parallel>, #tpu.dimension_semantics<arbitrary>], iteration_bounds = array<i64: 2, 2, 2>, scalar_prefetch = 0 : i64, scratch_operands = 4 : i64, tpu.core_type = #tpu.core_type<tc>, window_params = [{transform_indices = @transform_0, window_bounds = array<i64: 1, 32, 128>}, {transform_indices = @transform_1, window_bounds = array<i64: 1, 32, 128>}, {pipeline_mode = #tpu.pipeline_mode<synchronous>, transform_indices = @transform_2, window_bounds = array<i64: 8, 32>}, {pipeline_mode = #tpu.pipeline_mode<synchronous>, transform_indices = @transform_3, window_bounds = array<i64: 8, 1>}, {pipeline_mode = #tpu.pipeline_mode<synchronous>, transform_indices = @transform_4, window_bounds = array<i64: 40, 32>}, {pipeline_mode = #tpu.pipeline_mode<synchronous>, transform_indices = @transform_5, window_bounds = array<i64: 40, 1>}, {transform_indices = @transform_6, window_bounds = array<i64: 1>}, {transform_indices = @transform_7, window_bounds = array<i64: 1, 32, 128>}]} {
    %c0_i32 = arith.constant 0 : i32
    %0 = arith.cmpi eq, %arg2, %c0_i32 : i32
    %1 = arith.extui %0 : i1 to i32
    %c0_i32_0 = arith.constant 0 : i32
    %2 = arith.cmpi ne, %1, %c0_i32_0 : i32
    scf.if %2 {
      %cst_26 = arith.constant 0xFF800000 : f32
      %43 = vector.broadcast %cst_26 : f32 to vector<1x128xf32>
      %c0_27 = arith.constant 0 : index
      %c0_28 = arith.constant 0 : index
      %44 = vector.load %arg11[%c0_27, %c0_28] : memref<1x128xf32, #tpu.memory_space<vmem>>, vector<1x128xf32>
      tpu.vector_store %arg11[%c0_27, %c0_28], %43 {strides = array<i32>} : memref<1x128xf32, #tpu.memory_space<vmem>>, vector<1x128xf32>,
      %cst_29 = arith.constant 0.000000e+00 : f32
      %45 = vector.broadcast %cst_29 : f32 to vector<1x128xf32>
      %c0_30 = arith.constant 0 : index
      %c0_31 = arith.constant 0 : index
      %46 = vector.load %arg12[%c0_30, %c0_31] : memref<1x128xf32, #tpu.memory_space<vmem>>, vector<1x128xf32>
      tpu.vector_store %arg12[%c0_30, %c0_31], %45 {strides = array<i32>} : memref<1x128xf32, #tpu.memory_space<vmem>>, vector<1x128xf32>,
      %cst_32 = arith.constant 0.000000e+00 : f32
      %47 = vector.broadcast %cst_32 : f32 to vector<32x128xf32>
      %c0_33 = arith.constant 0 : index
      %c0_34 = arith.constant 0 : index
      %48 = vector.load %arg13[%c0_33, %c0_34] : memref<32x128xf32, #tpu.memory_space<vmem>>, vector<32x128xf32>
      tpu.vector_store %arg13[%c0_33, %c0_34], %47 {strides = array<i32>} : memref<32x128xf32, #tpu.memory_space<vmem>>, vector<32x128xf32>,
      %c0_35 = arith.constant 0 : index
      %c0_36 = arith.constant 0 : index
      %49 = vector.load %arg5[%c0_35, %c0_36] : memref<8x32xbf16, #tpu.memory_space<vmem>>, vector<8x32xbf16>
      %c0_37 = arith.constant 0 : index
      %c0_38 = arith.constant 0 : index
      %c0_39 = arith.constant 0 : index
      %50 = vector.load %arg3[%c0_37, %c0_38, %c0_39] : memref<1x32x128xf32, #tpu.memory_space<vmem>>, vector<1x32x128xf32>
      %51 = vector.shape_cast %50 : vector<1x32x128xf32> to vector<32x128xf32>
      %52 = arith.truncf %51 : vector<32x128xf32> to vector<32x128xbf16>
      %cst_40 = arith.constant dense<0.000000e+00> : vector<8x128xf32>
      %53 = tpu.matmul %49, %52, %cst_40 {dimension_numbers = #tpu.dot_dimension_numbers<[1], [0], [0], [1], [0, 0, 1, 1], [], []>} : vector<8x32xbf16>, vector<32x128xbf16>, vector<8x128xf32> -> vector<8x128xf32>
      %c0_41 = arith.constant 0 : index
      %c0_42 = arith.constant 0 : index
      %54 = vector.load %arg6[%c0_41, %c0_42] : memref<8x1xf32, #tpu.memory_space<vmem>>, vector<8x1xf32>
      %55 = vector.broadcast %54 : vector<8x1xf32> to vector<8x128xf32>
      %56 = arith.addf %53, %55 : vector<8x128xf32>
      %57 = arith.truncf %56 : vector<8x128xf32> to vector<8x128xbf16>
      %c0_43 = arith.constant 0 : index
      %c0_44 = arith.constant 0 : index
      %58 = vector.load %arg14[%c0_43, %c0_44] : memref<8x128xbf16, #tpu.memory_space<vmem>>, vector<8x128xbf16>
      tpu.vector_store %arg14[%c0_43, %c0_44], %57 {strides = array<i32>} : memref<8x128xbf16, #tpu.memory_space<vmem>>, vector<8x128xbf16>,
    } else {
    }
    %c0 = arith.constant 0 : index
    %c0_1 = arith.constant 0 : index
    %c0_2 = arith.constant 0 : index
    %3 = vector.load %arg4[%c0, %c0_1, %c0_2] : memref<1x32x128xf32, #tpu.memory_space<vmem>>, vector<1x32x128xf32>
    %4 = vector.shape_cast %3 : vector<1x32x128xf32> to vector<32x128xf32>
    %5 = arith.truncf %4 : vector<32x128xf32> to vector<32x128xbf16>
    %c0_3 = arith.constant 0 : index
    %c0_4 = arith.constant 0 : index
    %6 = vector.load %arg7[%c0_3, %c0_4] : memref<40x32xbf16, #tpu.memory_space<vmem>>, vector<40x32xbf16>
    %cst = arith.constant dense<0.000000e+00> : vector<40x128xf32>
    %7 = tpu.matmul %6, %5, %cst {dimension_numbers = #tpu.dot_dimension_numbers<[1], [0], [0], [1], [0, 0, 1, 1], [], []>} : vector<40x32xbf16>, vector<32x128xbf16>, vector<40x128xf32> -> vector<40x128xf32>
    %c0_5 = arith.constant 0 : index
    %c0_6 = arith.constant 0 : index
    %8 = vector.load %arg8[%c0_5, %c0_6] : memref<40x1xf32, #tpu.memory_space<vmem>>, vector<40x1xf32>
    %9 = vector.broadcast %8 : vector<40x1xf32> to vector<40x128xf32>
    %10 = arith.addf %7, %9 : vector<40x128xf32>
    %11 = vector.extract_strided_slice %10 {offsets = [0, 0], sizes = [8, 128], strides = [1, 1]} : vector<40x128xf32> to vector<8x128xf32>
    %12 = arith.truncf %11 : vector<8x128xf32> to vector<8x128xbf16>
    %13 = vector.extract_strided_slice %10 {offsets = [8, 0], sizes = [32, 128], strides = [1, 1]} : vector<40x128xf32> to vector<32x128xf32>
    %14 = arith.truncf %13 : vector<32x128xf32> to vector<32x128xbf16>
    %c0_7 = arith.constant 0 : index
    %c0_8 = arith.constant 0 : index
    %15 = vector.load %arg14[%c0_7, %c0_8] : memref<8x128xbf16, #tpu.memory_space<vmem>>, vector<8x128xbf16>
    %cst_9 = arith.constant dense<0.000000e+00> : vector<128x128xf32>
    %16 = tpu.matmul %12, %15, %cst_9 {dimension_numbers = #tpu.dot_dimension_numbers<[0], [0], [1], [1], [0, 1, 1, 1], [], []>} : vector<8x128xbf16>, vector<8x128xbf16>, vector<128x128xf32> -> vector<128x128xf32>
    %c0_10 = arith.constant 0 : index
    %c0_11 = arith.constant 0 : index
    %17 = vector.load %arg11[%c0_10, %c0_11] : memref<1x128xf32, #tpu.memory_space<vmem>>, vector<1x128xf32>
    %cst_12 = arith.constant dense<0xFF800000> : vector<128xf32>
    %18 = vector.multi_reduction <maximumf>, %16, %cst_12 [0] : vector<128x128xf32> to vector<128xf32>
    %19 = vector.shape_cast %18 : vector<128xf32> to vector<1x128xf32>
    %20 = arith.maximumf %17, %19 : vector<1x128xf32>
    %21 = arith.subf %17, %20 : vector<1x128xf32>
    %22 = math.exp %21 : vector<1x128xf32>
    %23 = vector.broadcast %20 : vector<1x128xf32> to vector<128x128xf32>
    %24 = arith.subf %16, %23 : vector<128x128xf32>
    %25 = math.exp %24 : vector<128x128xf32>
    %c0_13 = arith.constant 0 : index
    %c0_14 = arith.constant 0 : index
    %26 = vector.load %arg12[%c0_13, %c0_14] : memref<1x128xf32, #tpu.memory_space<vmem>>, vector<1x128xf32>
    %27 = arith.mulf %22, %26 : vector<1x128xf32>
    %cst_15 = arith.constant dense<0.000000e+00> : vector<128xf32>
    %28 = vector.multi_reduction <add>, %25, %cst_15 [0] : vector<128x128xf32> to vector<128xf32>
    %29 = vector.shape_cast %28 : vector<128xf32> to vector<1x128xf32>
    %30 = arith.addf %27, %29 : vector<1x128xf32>
    %c0_16 = arith.constant 0 : index
    %c0_17 = arith.constant 0 : index
    %31 = vector.load %arg12[%c0_16, %c0_17] : memref<1x128xf32, #tpu.memory_space<vmem>>, vector<1x128xf32>
    tpu.vector_store %arg12[%c0_16, %c0_17], %30 {strides = array<i32>} : memref<1x128xf32, #tpu.memory_space<vmem>>, vector<1x128xf32>,
    %c0_18 = arith.constant 0 : index
    %c0_19 = arith.constant 0 : index
    %32 = vector.load %arg13[%c0_18, %c0_19] : memref<32x128xf32, #tpu.memory_space<vmem>>, vector<32x128xf32>
    %33 = vector.broadcast %22 : vector<1x128xf32> to vector<32x128xf32>
    %34 = arith.mulf %33, %32 : vector<32x128xf32>
    %35 = arith.truncf %25 : vector<128x128xf32> to vector<128x128xbf16>
    %cst_20 = arith.constant dense<0.000000e+00> : vector<32x128xf32>
    %36 = tpu.matmul %14, %35, %cst_20 {dimension_numbers = #tpu.dot_dimension_numbers<[1], [0], [0], [1], [0, 0, 1, 1], [], []>} : vector<32x128xbf16>, vector<128x128xbf16>, vector<32x128xf32> -> vector<32x128xf32>
    %37 = arith.addf %34, %36 : vector<32x128xf32>
    %c0_21 = arith.constant 0 : index
    %c0_22 = arith.constant 0 : index
    %38 = vector.load %arg13[%c0_21, %c0_22] : memref<32x128xf32, #tpu.memory_space<vmem>>, vector<32x128xf32>
    tpu.vector_store %arg13[%c0_21, %c0_22], %37 {strides = array<i32>} : memref<32x128xf32, #tpu.memory_space<vmem>>, vector<32x128xf32>,
    %c0_23 = arith.constant 0 : index
    %c0_24 = arith.constant 0 : index
    %39 = vector.load %arg11[%c0_23, %c0_24] : memref<1x128xf32, #tpu.memory_space<vmem>>, vector<1x128xf32>
    tpu.vector_store %arg11[%c0_23, %c0_24], %20 {strides = array<i32>} : memref<1x128xf32, #tpu.memory_space<vmem>>, vector<1x128xf32>,
    %c1_i32 = arith.constant 1 : i32
    %40 = arith.cmpi eq, %arg2, %c1_i32 : i32
    %41 = arith.extui %40 : i1 to i32
    %c0_i32_25 = arith.constant 0 : i32
    %42 = arith.cmpi ne, %41, %c0_i32_25 : i32
    scf.if %42 {
      %c0_26 = arith.constant 0 : index
      %c0_27 = arith.constant 0 : index
      %43 = vector.load %arg13[%c0_26, %c0_27] : memref<32x128xf32, #tpu.memory_space<vmem>>, vector<32x128xf32>
      %c0_28 = arith.constant 0 : index
      %c0_29 = arith.constant 0 : index
      %44 = vector.load %arg12[%c0_28, %c0_29] : memref<1x128xf32, #tpu.memory_space<vmem>>, vector<1x128xf32>
      %45 = tpu.reciprocal %44 {approx = true} : vector<1x128xf32> -> vector<1x128xf32>
      %46 = vector.broadcast %45 : vector<1x128xf32> to vector<32x128xf32>
      %47 = arith.mulf %43, %46 : vector<32x128xf32>
      %c0_30 = arith.constant 0 : index
      %48 = memref.load %arg9[%c0_30] : memref<1xf32, #tpu.memory_space<smem>>
      %49 = vector.broadcast %48 : f32 to vector<32x128xf32>
      %50 = arith.mulf %49, %47 : vector<32x128xf32>
      %c0_31 = arith.constant 0 : index
      %c0_32 = arith.constant 0 : index
      %c0_33 = arith.constant 0 : index
      %51 = vector.load %arg3[%c0_31, %c0_32, %c0_33] : memref<1x32x128xf32, #tpu.memory_space<vmem>>, vector<1x32x128xf32>
      %52 = vector.shape_cast %51 : vector<1x32x128xf32> to vector<32x128xf32>
      %53 = arith.addf %50, %52 : vector<32x128xf32>
      %c0_34 = arith.constant 0 : index
      %c0_35 = arith.constant 0 : index
      %c0_36 = arith.constant 0 : index
      %54 = vector.load %arg10[%c0_34, %c0_35, %c0_36] : memref<1x32x128xf32, #tpu.memory_space<vmem>>, vector<1x32x128xf32>
      %55 = vector.shape_cast %54 : vector<1x32x128xf32> to vector<32x128xf32>
      %56 = vector.shape_cast %53 : vector<32x128xf32> to vector<1x32x128xf32>
      tpu.vector_store %arg10[%c0_34, %c0_35, %c0_36], %56 {strides = array<i32>} : memref<1x32x128xf32, #tpu.memory_space<vmem>>, vector<1x32x128xf32>,
    } else {
    }
    return
  }
  func.func @transform_0(%arg0: i32, %arg1: i32, %arg2: i32) -> (i32, i32, i32) {
    %c0_i32 = arith.constant 0 : i32
    %c0_i32_0 = arith.constant 0 : i32
    return %arg0, %c0_i32, %arg1 : i32, i32, i32
  }
  func.func @transform_1(%arg0: i32, %arg1: i32, %arg2: i32) -> (i32, i32, i32) {
    %c0_i32 = arith.constant 0 : i32
    %c0_i32_0 = arith.constant 0 : i32
    return %arg0, %c0_i32, %arg2 : i32, i32, i32
  }
  func.func @transform_2(%arg0: i32, %arg1: i32, %arg2: i32) -> (i32, i32) {
    %c0_i32 = arith.constant 0 : i32
    %c0_i32_0 = arith.constant 0 : i32
    %c0_i32_1 = arith.constant 0 : i32
    return %c0_i32, %c0_i32_0 : i32, i32
  }
  func.func @transform_3(%arg0: i32, %arg1: i32, %arg2: i32) -> (i32, i32) {
    %c0_i32 = arith.constant 0 : i32
    %c0_i32_0 = arith.constant 0 : i32
    %c0_i32_1 = arith.constant 0 : i32
    return %c0_i32, %c0_i32_0 : i32, i32
  }
  func.func @transform_4(%arg0: i32, %arg1: i32, %arg2: i32) -> (i32, i32) {
    %c0_i32 = arith.constant 0 : i32
    %c0_i32_0 = arith.constant 0 : i32
    %c0_i32_1 = arith.constant 0 : i32
    return %c0_i32, %c0_i32_0 : i32, i32
  }
  func.func @transform_5(%arg0: i32, %arg1: i32, %arg2: i32) -> (i32, i32) {
    %c0_i32 = arith.constant 0 : i32
    %c0_i32_0 = arith.constant 0 : i32
    %c0_i32_1 = arith.constant 0 : i32
    return %c0_i32, %c0_i32_0 : i32, i32
  }
  func.func @transform_6(%arg0: i32, %arg1: i32, %arg2: i32) -> i32 {
    %c0_i32 = arith.constant 0 : i32
    %c0_i32_0 = arith.constant 0 : i32
    return %c0_i32 : i32
  }
  func.func @transform_7(%arg0: i32, %arg1: i32, %arg2: i32) -> (i32, i32, i32) {
    %c0_i32 = arith.constant 0 : i32
    %c0_i32_0 = arith.constant 0 : i32
    return %arg0, %c0_i32, %arg1 : i32, i32, i32
  }
}

</mosaic_0001>

<llo_original>
// kernel: _lambda_.1
$region0: #{_lambda_.1}
  #allocation0 [shape = 'u32[]', space=smem, size = 0x4, offset = 0x4, fixed_abs, tag = 'smem constant byte address 0x4 - core index']
  #allocation1 [shape = 'u32[144,128]{1,0:T(1,128)}', space=vmem, size = 0x12000, scoped, tag = 'internal scratch']
  #allocation2 [shape = 'f32[1,128]{1,0:T(1,128)}', space=vmem, size = 0x200, scoped, tag = 'scratch operand']
  #allocation3 [shape = 'f32[1,128]{1,0:T(1,128)}', space=vmem, size = 0x200, scoped, tag = 'scratch operand']
  #allocation4 [shape = 'f32[32,128]{1,0:T(8,128)}', space=vmem, size = 0x4000, scoped, tag = 'scratch operand']
  #allocation5 [shape = 'bf16[8,128]{1,0:T(8,128)(2,1)}', space=vmem, size = 0x800, scoped, tag = 'scratch operand']
  #allocation6 [shape = 'f32[1]{0:T(128)S(6)}', space=smem, size = 0x200, scoped, tag = 'scoped memory for _lambda_.1']
  %s0 = inlined_call_operand.vmem [shape: f32[2,32,256], index: 0, kind: input, shape index: {}, may-alias: {0,1}]
  %s1 = inlined_call_operand.vmem [shape: f32[2,32,256], index: 1, kind: input, shape index: {}, may-alias: {0,1}]
  %s2 = inlined_call_operand.vmem [shape: bf16[8,32], index: 2, kind: input, shape index: {}]
  %s3 = inlined_call_operand.vmem [shape: f32[8,1], index: 3, kind: input, shape index: {}]
  %s4 = inlined_call_operand.vmem [shape: bf16[40,32], index: 4, kind: input, shape index: {}]
  %s5 = inlined_call_operand.vmem [shape: f32[40,1], index: 5, kind: input, shape index: {}]
  %s6 = inlined_call_operand.<no memory space> [shape: f32[1], index: 6, kind: input, shape index: {}]
  %s7 = inlined_call_operand.vmem [shape: f32[2,32,256], index: 7, kind: output, shape index: {}]
  %s8 = sld [smem:[#allocation0]]
  $region179: #{_lambda_.1} parent=0
    _
  %s10 = ssub.s32 1, %s8
  %s11 = scalar_select 0, %s10, %s8
  %12 = sst [smem:[#allocation6]] %s6
  $region1: #{_lambda_.1} parent=0
    #allocation7 [shape = 'u8[32768]{0}', space=vmem, size = 0x8000, scoped, tag = 'input window, operand 0']
    #allocation8 [shape = 'u8[32768]{0}', space=vmem, size = 0x8000, scoped, tag = 'input window, operand 1']
    #allocation9 [shape = 'u8[32768]{0}', space=vmem, size = 0x8000, scoped, tag = 'output window, operand 0']
    loop: start=0, step=1, limit=10
    $region2: #{_lambda_.1} parent=1 // loop_pre_header
      _
    $region3: #{_lambda_.1} parent=1 // loop_header
      %s14 = sphi 0, %s18
      %p15 = scmp.ge.s32.totalorder %s14, 10
      %s21 = sphi 0, %s40
      %s22 = sphi 0, %s36
      %s23 = sphi 0, %s32
      %s24 = sphi 0, %s21
      %s25 = sphi 0, %s22
      %s26 = sphi 0, %s23
      %s27 = sphi 0, %s24
      %s28 = sphi 0, %s25
      %s29 = sphi 0, %s26
      %s45 = sphi 0, %s47
      %s48 = sphi 0, %s45
      %s49 = sphi 0, %s48
      %s65 = sphi 0, %s49
      %s73 = sphi 0, %s75
      %s76 = sphi 0, %s73
      %s77 = sphi 0, %s76
      %s93 = sphi 0, %s77
      %s97 = sphi 0, %s97
      %s99 = sphi 0, %s97
      %s100 = sphi 0, %s99
      %s114 = sphi 0, %s100
      %s118 = sphi 0, %s118
      %s120 = sphi 0, %s118
      %s121 = sphi 0, %s120
      %s135 = sphi 0, %s121
      %s139 = sphi 0, %s139
      %s141 = sphi 0, %s139
      %s142 = sphi 0, %s141
      %s156 = sphi 0, %s142
      %s160 = sphi 0, %s160
      %s162 = sphi 0, %s160
      %s163 = sphi 0, %s162
      %s177 = sphi 0, %s163
      %s181 = sphi 0, %s181
      %s183 = sphi 0, %s181
      %s184 = sphi 0, %s183
      %s198 = sphi 0, %s184
      %s206 = sphi 0, %s208
      %s209 = sphi 0, %s206
      %s210 = sphi 0, %s209
      %s226 = sphi 0, %s210
    $region4: #{_lambda_.1} parent=1 // loop_header_branch
      %17 = sbr.rel (%p15) target = $region8
    $region5: #{_lambda_.1} parent=1 // loop_body
      %s19 = ssub.s32 %s14, 1
      %s20 = ssub.s32 %s14, 2
      %s30 = sadd.s32 1, %s23
      %p31 = scmp.ge.s32.totalorder %s30, 2
      %s32 = scalar_select %p31, 0, %s30
      %s33 = sadd.s32 1, %s22
      %s34 = scalar_select %p31, %s33, %s22
      %p35 = scmp.ge.s32.totalorder %s34, 2
      %s36 = scalar_select %p35, 0, %s34
      %s37 = sadd.s32 1, %s21
      %s38 = scalar_select %p35, %s37, %s21
      %p39 = scmp.ge.s32.totalorder %s38, 2
      %s40 = scalar_select %p39, 0, %s38
      %s41 = ssub.s32 %s21, %s40
      %s42 = ssub.s32 %s22, %s36
      %s43 = sor.u32 %s41, %s42
      %p44 = scmp.eq.s32.totalorder %s43, 0
      %s46 = sadd.s32 %s45, 1
      %s47 = scalar_select %p44, %s45, %s46
      %p50 = pneg %p44
      %p51 = scmp.eq.s32.totalorder %s14, 7
      %p52 = por %p50, %p51
      %p53 = scmp.ne.s32.totalorder %s45, %s48
      %p54 = scmp.eq.s32.totalorder %s14, 0
      %p55 = por %p53, %p54
      %p56 = scmp.ne.s32.totalorder %s45, %s48
      %p57 = scmp.eq.s32.totalorder %s19, 7
      %p58 = por %p56, %p57
      %p59 = scmp.ne.s32.totalorder %s48, %s49
      %p60 = scmp.eq.s32.totalorder %s19, 0
      %p61 = por %p59, %p60
      %p62 = scmp.ne.s32.totalorder %s48, %s49
      %p63 = scmp.eq.s32.totalorder %s20, 7
      %p64 = por %p62, %p63
      %p66 = scmp.ne.s32.totalorder %s49, %s65
      %p67 = scmp.eq.s32.totalorder %s20, 0
      %p68 = por %p66, %p67
      %s69 = ssub.s32 %s21, %s40
      %s70 = ssub.s32 %s23, %s32
      %s71 = sor.u32 %s69, %s70
      %p72 = scmp.eq.s32.totalorder %s71, 0
      %s74 = sadd.s32 %s73, 1
      %s75 = scalar_select %p72, %s73, %s74
      %p78 = pneg %p72
      %p79 = scmp.eq.s32.totalorder %s14, 7
      %p80 = por %p78, %p79
      %p81 = scmp.ne.s32.totalorder %s73, %s76
      %p82 = scmp.eq.s32.totalorder %s14, 0
      %p83 = por %p81, %p82
      %p84 = scmp.ne.s32.totalorder %s73, %s76
      %p85 = scmp.eq.s32.totalorder %s19, 7
      %p86 = por %p84, %p85
      %p87 = scmp.ne.s32.totalorder %s76, %s77
      %p88 = scmp.eq.s32.totalorder %s19, 0
      %p89 = por %p87, %p88
      %p90 = scmp.ne.s32.totalorder %s76, %s77
      %p91 = scmp.eq.s32.totalorder %s20, 7
      %p92 = por %p90, %p91
      %p94 = scmp.ne.s32.totalorder %s77, %s93
      %p95 = scmp.eq.s32.totalorder %s20, 0
      %p96 = por %p94, %p95
      %s98 = sadd.s32 %s97, 1
      %p101 = scmp.eq.s32.totalorder %s14, 7
      %p102 = scmp.ne.s32.totalorder %s97, %s99
      %p103 = scmp.eq.s32.totalorder %s14, 0
      %p104 = por %p102, %p103
      %p105 = scmp.ne.s32.totalorder %s97, %s99
      %p106 = scmp.eq.s32.totalorder %s19, 7
      %p107 = por %p105, %p106
      %p108 = scmp.ne.s32.totalorder %s99, %s100
      %p109 = scmp.eq.s32.totalorder %s19, 0
      %p110 = por %p108, %p109
      %p111 = scmp.ne.s32.totalorder %s99, %s100
      %p112 = scmp.eq.s32.totalorder %s20, 7
      %p113 = por %p111, %p112
      %p115 = scmp.ne.s32.totalorder %s100, %s114
      %p116 = scmp.eq.s32.totalorder %s20, 0
      %p117 = por %p115, %p116
      %s119 = sadd.s32 %s118, 1
      %p122 = scmp.eq.s32.totalorder %s14, 7
      %p123 = scmp.ne.s32.totalorder %s118, %s120
      %p124 = scmp.eq.s32.totalorder %s14, 0
      %p125 = por %p123, %p124
      %p126 = scmp.ne.s32.totalorder %s118, %s120
      %p127 = scmp.eq.s32.totalorder %s19, 7
      %p128 = por %p126, %p127
      %p129 = scmp.ne.s32.totalorder %s120, %s121
      %p130 = scmp.eq.s32.totalorder %s19, 0
      %p131 = por %p129, %p130
      %p132 = scmp.ne.s32.totalorder %s120, %s121
      %p133 = scmp.eq.s32.totalorder %s20, 7
      %p134 = por %p132, %p133
      %p136 = scmp.ne.s32.totalorder %s121, %s135
      %p137 = scmp.eq.s32.totalorder %s20, 0
      %p138 = por %p136, %p137
      %s140 = sadd.s32 %s139, 1
      %p143 = scmp.eq.s32.totalorder %s14, 7
      %p144 = scmp.ne.s32.totalorder %s139, %s141
      %p145 = scmp.eq.s32.totalorder %s14, 0
      %p146 = por %p144, %p145
      %p147 = scmp.ne.s32.totalorder %s139, %s141
      %p148 = scmp.eq.s32.totalorder %s19, 7
      %p149 = por %p147, %p148
      %p150 = scmp.ne.s32.totalorder %s141, %s142
      %p151 = scmp.eq.s32.totalorder %s19, 0
      %p152 = por %p150, %p151
      %p153 = scmp.ne.s32.totalorder %s141, %s142
      %p154 = scmp.eq.s32.totalorder %s20, 7
      %p155 = por %p153, %p154
      %p157 = scmp.ne.s32.totalorder %s142, %s156
      %p158 = scmp.eq.s32.totalorder %s20, 0
      %p159 = por %p157, %p158
      %s161 = sadd.s32 %s160, 1
      %p164 = scmp.eq.s32.totalorder %s14, 7
      %p165 = scmp.ne.s32.totalorder %s160, %s162
      %p166 = scmp.eq.s32.totalorder %s14, 0
      %p167 = por %p165, %p166
      %p168 = scmp.ne.s32.totalorder %s160, %s162
      %p169 = scmp.eq.s32.totalorder %s19, 7
      %p170 = por %p168, %p169
      %p171 = scmp.ne.s32.totalorder %s162, %s163
      %p172 = scmp.eq.s32.totalorder %s19, 0
      %p173 = por %p171, %p172
      %p174 = scmp.ne.s32.totalorder %s162, %s163
      %p175 = scmp.eq.s32.totalorder %s20, 7
      %p176 = por %p174, %p175
      %p178 = scmp.ne.s32.totalorder %s163, %s177
      %p179 = scmp.eq.s32.totalorder %s20, 0
      %p180 = por %p178, %p179
      %s182 = sadd.s32 %s181, 1
      %p185 = scmp.eq.s32.totalorder %s14, 7
      %p186 = scmp.ne.s32.totalorder %s181, %s183
      %p187 = scmp.eq.s32.totalorder %s14, 0
      %p188 = por %p186, %p187
      %p189 = scmp.ne.s32.totalorder %s181, %s183
      %p190 = scmp.eq.s32.totalorder %s19, 7
      %p191 = por %p189, %p190
      %p192 = scmp.ne.s32.totalorder %s183, %s184
      %p193 = scmp.eq.s32.totalorder %s19, 0
      %p194 = por %p192, %p193
      %p195 = scmp.ne.s32.totalorder %s183, %s184
      %p196 = scmp.eq.s32.totalorder %s20, 7
      %p197 = por %p195, %p196
      %p199 = scmp.ne.s32.totalorder %s184, %s198
      %p200 = scmp.eq.s32.totalorder %s20, 0
      %p201 = por %p199, %p200
      %s202 = ssub.s32 %s21, %s40
      %s203 = ssub.s32 %s22, %s36
      %s204 = sor.u32 %s202, %s203
      %p205 = scmp.eq.s32.totalorder %s204, 0
      %s207 = sadd.s32 %s206, 1
      %s208 = scalar_select %p205, %s206, %s207
      %p211 = pneg %p205
      %p212 = scmp.eq.s32.totalorder %s14, 7
      %p213 = por %p211, %p212
      %p214 = scmp.ne.s32.totalorder %s206, %s209
      %p215 = scmp.eq.s32.totalorder %s14, 0
      %p216 = por %p214, %p215
      %p217 = scmp.ne.s32.totalorder %s206, %s209
      %p218 = scmp.eq.s32.totalorder %s19, 7
      %p219 = por %p217, %p218
      %p220 = scmp.ne.s32.totalorder %s209, %s210
      %p221 = scmp.eq.s32.totalorder %s19, 0
      %p222 = por %p220, %p221
      %p223 = scmp.ne.s32.totalorder %s209, %s210
      %p224 = scmp.eq.s32.totalorder %s20, 7
      %p225 = por %p223, %p224
      %p227 = scmp.ne.s32.totalorder %s210, %s226
      %p228 = scmp.eq.s32.totalorder %s20, 0
      %p229 = por %p227, %p228
      %p230 = scmp.le.s32.totalorder 1, %s14
      %p231 = scmp.lt.s32.totalorder %s14, 9
      %p232 = pnand %p230, %p231
      %p233 = pneg %p232
      // Predicated region
      $region9: #{_lambda_.1} parent=5 // pred_check
        _
      $region10: #{_lambda_.1} parent=5 // pred_check_branch
        %235 = sbr.rel (%p232) target = $region12
      $region11: #{_lambda_.1} parent=5 // pred_region
        %s236 = ssub.s32 %s14, 1
        // Predicated region
        $region13: #{_lambda_.1} parent=11 // pred_check
          %p237 = pneg %p110
        $region14: #{_lambda_.1} parent=11 // pred_check_branch
          %239 = sbr.rel (%p237) target = $region16
        $region15: #{_lambda_.1} parent=11 // pred_region
          _
        $region16: #{_lambda_.1} parent=11 // pred_fallthru
          _
        // Predicated region
        $region17: #{_lambda_.1} parent=11 // pred_check
          %p240 = pneg %p131
        $region18: #{_lambda_.1} parent=11 // pred_check_branch
          %242 = sbr.rel (%p240) target = $region20
        $region19: #{_lambda_.1} parent=11 // pred_region
          _
        $region20: #{_lambda_.1} parent=11 // pred_fallthru
          _
        // Predicated region
        $region21: #{_lambda_.1} parent=11 // pred_check
          %p243 = pneg %p152
        $region22: #{_lambda_.1} parent=11 // pred_check_branch
          %245 = sbr.rel (%p243) target = $region24
        $region23: #{_lambda_.1} parent=11 // pred_region
          _
        $region24: #{_lambda_.1} parent=11 // pred_fallthru
          _
        // Predicated region
        $region25: #{_lambda_.1} parent=11 // pred_check
          %p246 = pneg %p173
        $region26: #{_lambda_.1} parent=11 // pred_check_branch
          %248 = sbr.rel (%p246) target = $region28
        $region27: #{_lambda_.1} parent=11 // pred_region
          _
        $region28: #{_lambda_.1} parent=11 // pred_fallthru
          _
        // Predicated region
        $region29: #{_lambda_.1} parent=11 // pred_check
          %p249 = pneg %p194
        $region30: #{_lambda_.1} parent=11 // pred_check_branch
          %251 = sbr.rel (%p249) target = $region32
        $region31: #{_lambda_.1} parent=11 // pred_region
          _
        $region32: #{_lambda_.1} parent=11 // pred_fallthru
          _
      $region12: #{_lambda_.1} parent=5 // pred_fallthru
        _
      %p252 = scmp.lt.s32.totalorder %s14, 8
      // Predicated region
      $region33: #{_lambda_.1} parent=5 // pred_check
        %p253 = pneg %p252
      $region34: #{_lambda_.1} parent=5 // pred_check_branch
        %255 = sbr.rel (%p253) target = $region36
      $region35: #{_lambda_.1} parent=5 // pred_region
        // Predicated region
        $region37: #{_lambda_.1} parent=35 // pred_check
          %p256 = pneg %p55
        $region38: #{_lambda_.1} parent=35 // pred_check_branch
          %258 = sbr.rel (%p256) target = $region40
        $region39: #{_lambda_.1} parent=35 // pred_region
          %s259 = sand.u32 %s45, 1
          %s260 = sand.u32 %s45, 1
          %s261 = smul.addr %s260, 32
          %s262 = scalar_lea.vmem [#allocation7], %s261
          %s263 = smul.addr %s21, 8
          %s264 = sadd.s32 %s22, %s263
          %s265 = smul.addr %s264, 8
          %s266 = scalar_lea.vmem %s0, %s265
          // Predicated region
          $region41: #{_lambda_.1} parent=39 // pred_check
            _
          $region42: #{_lambda_.1} parent=39 // pred_check_branch
            %268 = sbr.rel (0) target = $region44
          $region43: #{_lambda_.1} parent=39 // pred_region
            // Predicated region
            $region45: #{_lambda_.1} parent=43 // pred_check
              _
            $region46: #{_lambda_.1} parent=43 // pred_check_branch
              %270 = sbr.rel (0) target = $region48
            $region47: #{_lambda_.1} parent=43 // pred_region
              // Predicated region
              $region60: #{_lambda_.1} parent=47 // pred_check
                _
              $region61: #{_lambda_.1} parent=47 // pred_check_branch
                %292 = sbr.rel (0) target = $region63
              $region62: #{_lambda_.1} parent=47 // pred_region
                loop: start=0, step=1, limit=1
                $region64: #{_lambda_.1} parent=62 // loop_pre_header
                  _
                $region65: #{_lambda_.1} parent=62 // loop_header
                  %s294 = sphi 0, %s298
                  %p295 = scmp.ge.s32.totalorder %s294, 1
                  %s299 = sphi %s266, %s266
                  %s300 = sphi %s262, %s262
                $region66: #{_lambda_.1} parent=62 // loop_header_branch
                  %297 = sbr.rel (%p295) target = $region70
                $region67: #{_lambda_.1} parent=62 // loop_body
                  %v301 = vld [vmem:[%s299] sm:$0xff]
                  %302 = vst [vmem:[%s300] sm:$0xff] %v301
                  %v303 = vld [vmem:[%s299 + $0x10] sm:$0xff]
                  %304 = vst [vmem:[%s300 + $0x8] sm:$0xff] %v303
                  %v305 = vld [vmem:[%s299 + $0x20] sm:$0xff]
                  %306 = vst [vmem:[%s300 + $0x10] sm:$0xff] %v305
                  %v307 = vld [vmem:[%s299 + $0x30] sm:$0xff]
                  %308 = vst [vmem:[%s300 + $0x18] sm:$0xff] %v307
                $region68: #{_lambda_.1} parent=62 // loop_footer
                  %s298 = sadd.s32 1, %s294
                $region69: #{_lambda_.1} parent=62 // loop_footer_branch
                  %293 = sbr.rel target = $region65
                $region70: #{_lambda_.1} parent=62 // loop_exit
                  _
              $region63: #{_lambda_.1} parent=47 // pred_fallthru
                _
              // Predicated region
              $region71: #{_lambda_.1} parent=47 // pred_check
                _
              $region72: #{_lambda_.1} parent=47 // pred_check_branch
                %310 = sbr.rel target = $region74
              $region73: #{_lambda_.1} parent=47 // pred_region
                _
              $region74: #{_lambda_.1} parent=47 // pred_fallthru
                _
            $region48: #{_lambda_.1} parent=43 // pred_fallthru
              _
            // Predicated region
            $region49: #{_lambda_.1} parent=43 // pred_check
              _
            $region50: #{_lambda_.1} parent=43 // pred_check_branch
              %272 = sbr.rel target = $region52
            $region51: #{_lambda_.1} parent=43 // pred_region
              %s274 = ssub.s32 256, 1
              loop: start=0, step=1, limit=1
              $region53: #{_lambda_.1} parent=51 // loop_pre_header
                _
              $region54: #{_lambda_.1} parent=51 // loop_header
                %s276 = sphi 0, %s280
                %p277 = scmp.ge.s32.totalorder %s276, 1
                %s281 = sphi %s266, %s266
                %s282 = sphi %s262, %s262
              $region55: #{_lambda_.1} parent=51 // loop_header_branch
                %279 = sbr.rel (%p277) target = $region59
              $region56: #{_lambda_.1} parent=51 // loop_body
                %v283 = vld [vmem:[%s281] sm:%s274]
                %284 = vst [vmem:[%s282] sm:%s274] %v283
                %v285 = vld [vmem:[%s281 + $0x10] sm:%s274]
                %286 = vst [vmem:[%s282 + $0x8] sm:%s274] %v285
                %v287 = vld [vmem:[%s281 + $0x20] sm:%s274]
                %288 = vst [vmem:[%s282 + $0x10] sm:%s274] %v287
                %v289 = vld [vmem:[%s281 + $0x30] sm:%s274]
                %290 = vst [vmem:[%s282 + $0x18] sm:%s274] %v289
              $region57: #{_lambda_.1} parent=51 // loop_footer
                %s280 = sadd.s32 1, %s276
              $region58: #{_lambda_.1} parent=51 // loop_footer_branch
                %275 = sbr.rel target = $region54
              $region59: #{_lambda_.1} parent=51 // loop_exit
                _
            $region52: #{_lambda_.1} parent=43 // pred_fallthru
              _
          $region44: #{_lambda_.1} parent=39 // pred_fallthru
            _
          %311 = vnop
        $region40: #{_lambda_.1} parent=35 // pred_fallthru
          _
        // Predicated region
        $region75: #{_lambda_.1} parent=35 // pred_check
          %p312 = pneg %p83
        $region76: #{_lambda_.1} parent=35 // pred_check_branch
          %314 = sbr.rel (%p312) target = $region78
        $region77: #{_lambda_.1} parent=35 // pred_region
          %s315 = sand.u32 %s73, 1
          %s316 = sand.u32 %s73, 1
          %s317 = smul.addr %s316, 32
          %s318 = scalar_lea.vmem [#allocation8], %s317
          %s319 = smul.addr %s21, 8
          %s320 = sadd.s32 %s23, %s319
          %s321 = smul.addr %s320, 8
          %s322 = scalar_lea.vmem %s1, %s321
          // Predicated region
          $region79: #{_lambda_.1} parent=77 // pred_check
            _
          $region80: #{_lambda_.1} parent=77 // pred_check_branch
            %324 = sbr.rel (0) target = $region82
          $region81: #{_lambda_.1} parent=77 // pred_region
            // Predicated region
            $region83: #{_lambda_.1} parent=81 // pred_check
              _
            $region84: #{_lambda_.1} parent=81 // pred_check_branch
              %326 = sbr.rel (0) target = $region86
            $region85: #{_lambda_.1} parent=81 // pred_region
              // Predicated region
              $region98: #{_lambda_.1} parent=85 // pred_check
                _
              $region99: #{_lambda_.1} parent=85 // pred_check_branch
                %348 = sbr.rel (0) target = $region101
              $region100: #{_lambda_.1} parent=85 // pred_region
                loop: start=0, step=1, limit=1
                $region102: #{_lambda_.1} parent=100 // loop_pre_header
                  _
                $region103: #{_lambda_.1} parent=100 // loop_header
                  %s350 = sphi 0, %s354
                  %p351 = scmp.ge.s32.totalorder %s350, 1
                  %s355 = sphi %s322, %s322
                  %s356 = sphi %s318, %s318
                $region104: #{_lambda_.1} parent=100 // loop_header_branch
                  %353 = sbr.rel (%p351) target = $region108
                $region105: #{_lambda_.1} parent=100 // loop_body
                  %v357 = vld [vmem:[%s355] sm:$0xff]
                  %358 = vst [vmem:[%s356] sm:$0xff] %v357
                  %v359 = vld [vmem:[%s355 + $0x10] sm:$0xff]
                  %360 = vst [vmem:[%s356 + $0x8] sm:$0xff] %v359
                  %v361 = vld [vmem:[%s355 + $0x20] sm:$0xff]
                  %362 = vst [vmem:[%s356 + $0x10] sm:$0xff] %v361
                  %v363 = vld [vmem:[%s355 + $0x30] sm:$0xff]
                  %364 = vst [vmem:[%s356 + $0x18] sm:$0xff] %v363
                $region106: #{_lambda_.1} parent=100 // loop_footer
                  %s354 = sadd.s32 1, %s350
                $region107: #{_lambda_.1} parent=100 // loop_footer_branch
                  %349 = sbr.rel target = $region103
                $region108: #{_lambda_.1} parent=100 // loop_exit
                  _
              $region101: #{_lambda_.1} parent=85 // pred_fallthru
                _
              // Predicated region
              $region109: #{_lambda_.1} parent=85 // pred_check
                _
              $region110: #{_lambda_.1} parent=85 // pred_check_branch
                %366 = sbr.rel target = $region112
              $region111: #{_lambda_.1} parent=85 // pred_region
                _
              $region112: #{_lambda_.1} parent=85 // pred_fallthru
                _
            $region86: #{_lambda_.1} parent=81 // pred_fallthru
              _
            // Predicated region
            $region87: #{_lambda_.1} parent=81 // pred_check
              _
            $region88: #{_lambda_.1} parent=81 // pred_check_branch
              %328 = sbr.rel target = $region90
            $region89: #{_lambda_.1} parent=81 // pred_region
              %s330 = ssub.s32 256, 1
              loop: start=0, step=1, limit=1
              $region91: #{_lambda_.1} parent=89 // loop_pre_header
                _
              $region92: #{_lambda_.1} parent=89 // loop_header
                %s332 = sphi 0, %s336
                %p333 = scmp.ge.s32.totalorder %s332, 1
                %s337 = sphi %s322, %s322
                %s338 = sphi %s318, %s318
              $region93: #{_lambda_.1} parent=89 // loop_header_branch
                %335 = sbr.rel (%p333) target = $region97
              $region94: #{_lambda_.1} parent=89 // loop_body
                %v339 = vld [vmem:[%s337] sm:%s330]
                %340 = vst [vmem:[%s338] sm:%s330] %v339
                %v341 = vld [vmem:[%s337 + $0x10] sm:%s330]
                %342 = vst [vmem:[%s338 + $0x8] sm:%s330] %v341
                %v343 = vld [vmem:[%s337 + $0x20] sm:%s330]
                %344 = vst [vmem:[%s338 + $0x10] sm:%s330] %v343
                %v345 = vld [vmem:[%s337 + $0x30] sm:%s330]
                %346 = vst [vmem:[%s338 + $0x18] sm:%s330] %v345
              $region95: #{_lambda_.1} parent=89 // loop_footer
                %s336 = sadd.s32 1, %s332
              $region96: #{_lambda_.1} parent=89 // loop_footer_branch
                %331 = sbr.rel target = $region92
              $region97: #{_lambda_.1} parent=89 // loop_exit
                _
            $region90: #{_lambda_.1} parent=81 // pred_fallthru
              _
          $region82: #{_lambda_.1} parent=77 // pred_fallthru
            _
          %367 = vnop
        $region78: #{_lambda_.1} parent=35 // pred_fallthru
          _
      $region36: #{_lambda_.1} parent=5 // pred_fallthru
        _
      %p368 = scmp.le.s32.totalorder 1, %s14
      %p369 = scmp.lt.s32.totalorder %s14, 9
      %p370 = pnand %p368, %p369
      %p371 = pneg %p370
      // Predicated region
      $region113: #{_lambda_.1} parent=5 // pred_check
        _
      $region114: #{_lambda_.1} parent=5 // pred_check_branch
        %373 = sbr.rel (%p370) target = $region116
      $region115: #{_lambda_.1} parent=5 // pred_region
        %s374 = ssub.s32 %s14, 1
        %s375 = sand.u32 %s48, 1
        %s376 = sand.u32 %s48, 1
        %s377 = smul.addr %s376, 32
        %s378 = scalar_lea.vmem [#allocation7], %s377
        // Predicated region
        $region117: #{_lambda_.1} parent=115 // pred_check
          %p379 = pneg %p61
        $region118: #{_lambda_.1} parent=115 // pred_check_branch
          %381 = sbr.rel (%p379) target = $region120
        $region119: #{_lambda_.1} parent=115 // pred_region
          _
        $region120: #{_lambda_.1} parent=115 // pred_fallthru
          _
        %s382 = sand.u32 %s76, 1
        %s383 = sand.u32 %s76, 1
        %s384 = smul.addr %s383, 32
        %s385 = scalar_lea.vmem [#allocation8], %s384
        // Predicated region
        $region121: #{_lambda_.1} parent=115 // pred_check
          %p386 = pneg %p89
        $region122: #{_lambda_.1} parent=115 // pred_check_branch
          %388 = sbr.rel (%p386) target = $region124
        $region123: #{_lambda_.1} parent=115 // pred_region
          _
        $region124: #{_lambda_.1} parent=115 // pred_fallthru
          _
        %s389 = sand.u32 %s48, 1
        %s390 = sand.u32 %s48, 1
        %s391 = smul.addr %s390, 32
        %s392 = scalar_lea.vmem [#allocation7], %s391
        %p393 = pneg %p61
        %p394 = pneg %p58
        %s395 = sand.u32 %s76, 1
        %s396 = sand.u32 %s76, 1
        %s397 = smul.addr %s396, 32
        %s398 = scalar_lea.vmem [#allocation8], %s397
        %p399 = pneg %p89
        %p400 = pneg %p86
        %p401 = pneg %p110
        %p402 = pneg %p107
        %p403 = pneg %p131
        %p404 = pneg %p128
        %p405 = pneg %p152
        %p406 = pneg %p149
        %p407 = pneg %p173
        %p408 = pneg %p170
        %p409 = pneg %p194
        %p410 = pneg %p191
        %p411 = pneg %p222
        %p412 = pneg %p219
        %s413 = sand.u32 %s209, 1
        %s414 = sand.u32 %s209, 1
        %s415 = smul.addr %s414, 32
        %s416 = scalar_lea.vmem [#allocation9], %s415
        %p418 = scmp.eq.s32.totalorder %s26, 0
        // Predicated region
        $region125: #{_lambda_.1} parent=115 // pred_check
          %p419 = pneg %p418
        $region126: #{_lambda_.1} parent=115 // pred_check_branch
          %421 = sbr.rel (%p419) target = $region128
        $region127: #{_lambda_.1} parent=115 // pred_region
          %422 = vst [vmem:[#allocation2] sm:$0x1] -inf
          %423 = vst [vmem:[#allocation3] sm:$0x1] 0.0
          %424 = vst [vmem:[#allocation4] sm:$0xff] 0.0
          %425 = vst [vmem:[#allocation4 + $0x8] sm:$0xff] 0.0
          %426 = vst [vmem:[#allocation4 + $0x10] sm:$0xff] 0.0
          %427 = vst [vmem:[#allocation4 + $0x18] sm:$0xff] 0.0
          %v428 = vld [vmem:[%s2] sm:$0xf]
          %v429 = vld [vmem:[%s378] sm:$0xff]
          %v430 = vld [vmem:[%s378 + $0x8] sm:$0xff]
          %v431 = vld [vmem:[%s378 + $0x10] sm:$0xff]
          %v432 = vld [vmem:[%s378 + $0x18] sm:$0xff]
          %v433 = vpack.c.bf16 %v430, %v429
          %v434 = vpack.c.bf16 %v432, %v431
          %v435 = vld [vmem:[%s3] sm:$0xff]
          %437 = vset.pattern.permute.xlu0 0
          %438 = vperm.xlu0 %437, %v435
          %v439 = vpop.permute.xlu0 %438
          %vm441 = vcmask 261120
          %v443 = vsel %vm441, %v428, 0
          %445 = vmatprep.subr.bf16.mxu0 0
          %446 = vmatpush1.bf16.msra.mxu0 0
          %447 = vmatprep.subr.bf16.mxu0 0
          %448 = vmatpush1.bf16.msra.mxu0 0
          %449 = vmatprep.subr.bf16.mxu0 0
          %450 = vmatpush1.bf16.msra.mxu0 0
          %451 = vmatprep.subr.bf16.mxu0 0
          %452 = vmatpush1.bf16.msra.mxu0 0
          %453 = vmatprep.subr.bf16.mxu0 0
          %454 = vmatpush1.bf16.msra.mxu0 0
          %455 = vmatprep.subr.bf16.mxu0 0
          %456 = vmatpush1.bf16.msra.mxu0 0
          %457 = vmatprep.subr.bf16.mxu0 0
          %458 = vmatpush1.bf16.msra.mxu0 %v434
          %459 = vmatprep.subr.bf16.mxu0 0
          %460 = vmatpush1.bf16.msra.mxu0 %v433
          %461 = vmatprep.subr.bf16.mxu0 0
          %462 = vmatpush2.bf16.msra.mxu0 0
          %463 = vmatprep.subr.bf16.mxu0 0
          %464 = vmatpush2.bf16.msra.mxu0 0
          %465 = vmatprep.subr.bf16.mxu0 0
          %466 = vmatpush2.bf16.msra.mxu0 0
          %467 = vmatprep.subr.bf16.mxu0 0
          %468 = vmatpush2.bf16.msra.mxu0 0
          %469 = vmatprep.subr.bf16.mxu0 0
          %470 = vmatpush2.bf16.msra.mxu0 0
          %471 = vmatprep.subr.bf16.mxu0 0
          %472 = vmatpush2.bf16.msra.mxu0 0
          %473 = vmatprep.subr.bf16.mxu0 0
          %474 = vmatpush2.bf16.msra.mxu0 0
          %475 = vmatprep.subr.bf16.mxu0 0
          %476 = vmatpush2.bf16.msra.mxu0 0
          %477 = vmatprep.mubr.bf16.mxu0 0
          %478 = vmatmul.mubr.bf16.gmra.mxu0 %v443
          %v479 = vpop.f32.mrf.mxu0
          %v480 = vadd.f32 %v439, %v479
          %v481 = vpop.f32.mrf.mxu0
          %v482 = vpop.f32.mrf.mxu0
          %v483 = vpop.f32.mrf.mxu0
          %484 = vdwg.mxu0
          %v485 = vpack.c.bf16 %v480, %v480
          %486 = vst [vmem:[#allocation5] sm:$0xf] %v485
        $region128: #{_lambda_.1} parent=115 // pred_fallthru
          _
        %v487 = vld [vmem:[%s385] sm:$0xff]
        %v488 = vld [vmem:[%s385 + $0x8] sm:$0xff]
        %v489 = vld [vmem:[%s385 + $0x10] sm:$0xff]
        %v490 = vld [vmem:[%s385 + $0x18] sm:$0xff]
        %v491 = vpack.c.bf16 %v488, %v487
        %v492 = vpack.c.bf16 %v490, %v489
        %v493 = vld [vmem:[%s4] sm:$0xf]
        %v494 = vld [vmem:[%s4 + $0x4] sm:$0xf]
        %v495 = vld [vmem:[%s4 + $0x8] sm:$0xf]
        %v496 = vld [vmem:[%s4 + $0xc] sm:$0xf]
        %v497 = vld [vmem:[%s4 + $0x10] sm:$0xf]
        %v498 = vld [vmem:[%s5] sm:$0xff]
        %v499 = vld [vmem:[%s5 + $0x8] sm:$0xff]
        %v500 = vld [vmem:[%s5 + $0x10] sm:$0xff]
        %v501 = vld [vmem:[%s5 + $0x18] sm:$0xff]
        %v502 = vld [vmem:[%s5 + $0x20] sm:$0xff]
        %504 = vset.pattern.permute.xlu0 0
        %505 = vperm.xlu0 %504, %v498
        %v506 = vpop.permute.xlu0 %505
        %509 = vset.pattern.permute.xlu0 0
        %510 = vperm.xlu0 %509, %v499
        %v511 = vpop.permute.xlu0 %510
        %514 = vset.pattern.permute.xlu0 0
        %515 = vperm.xlu0 %514, %v500
        %v516 = vpop.permute.xlu0 %515
        %519 = vset.pattern.permute.xlu0 0
        %520 = vperm.xlu0 %519, %v501
        %v521 = vpop.permute.xlu0 %520
        %524 = vset.pattern.permute.xlu0 0
        %525 = vperm.xlu0 %524, %v502
        %v526 = vpop.permute.xlu0 %525
        %v533 = vunpack.c.l.b16 %v493
        %v534 = vunpack.c.l.b16 %v494
        %v535 = vunpack.c.l.b16 %v495
        %v536 = vunpack.c.l.b16 %v496
        %v537 = vunpack.c.l.b16 %v497
        %v538 = vpack.c.b16 %v534, %v533
        %v539 = vpack.c.b16 %v536, %v535
        %v540 = vpack.c.b16 %v537, %v537
        %vm541 = vcmask 261120
        %v543 = vsel %vm541, %v538, 0
        %v546 = vsel %vm541, %v539, 0
        %v549 = vsel %vm541, %v540, 0
        %551 = vmatprep.subr.bf16.mxu0 0
        %552 = vmatpush1.bf16.msra.mxu0 0
        %553 = vmatprep.subr.bf16.mxu0 0
        %554 = vmatpush1.bf16.msra.mxu0 0
        %555 = vmatprep.subr.bf16.mxu0 0
        %556 = vmatpush1.bf16.msra.mxu0 0
        %557 = vmatprep.subr.bf16.mxu0 0
        %558 = vmatpush1.bf16.msra.mxu0 0
        %559 = vmatprep.subr.bf16.mxu0 0
        %560 = vmatpush1.bf16.msra.mxu0 0
        %561 = vmatprep.subr.bf16.mxu0 0
        %562 = vmatpush1.bf16.msra.mxu0 0
        %563 = vmatprep.subr.bf16.mxu0 0
        %564 = vmatpush1.bf16.msra.mxu0 %v492
        %565 = vmatprep.subr.bf16.mxu0 0
        %566 = vmatpush1.bf16.msra.mxu0 %v491
        %567 = vmatprep.subr.bf16.mxu0 0
        %568 = vmatpush2.bf16.msra.mxu0 0
        %569 = vmatprep.subr.bf16.mxu0 0
        %570 = vmatpush2.bf16.msra.mxu0 0
        %571 = vmatprep.subr.bf16.mxu0 0
        %572 = vmatpush2.bf16.msra.mxu0 0
        %573 = vmatprep.subr.bf16.mxu0 0
        %574 = vmatpush2.bf16.msra.mxu0 0
        %575 = vmatprep.subr.bf16.mxu0 0
        %576 = vmatpush2.bf16.msra.mxu0 0
        %577 = vmatprep.subr.bf16.mxu0 0
        %578 = vmatpush2.bf16.msra.mxu0 0
        %579 = vmatprep.subr.bf16.mxu0 0
        %580 = vmatpush2.bf16.msra.mxu0 0
        %581 = vmatprep.subr.bf16.mxu0 0
        %582 = vmatpush2.bf16.msra.mxu0 0
        %583 = vmatprep.mubr.bf16.mxu0 0
        %584 = vmatmul.mubr.bf16.gmra.mxu0 %v543
        %v585 = vpop.f32.mrf.mxu0
        %v586 = vadd.f32 %v506, %v585
        %v587 = vpop.f32.mrf.mxu0
        %v588 = vpop.f32.mrf.mxu0
        %v589 = vadd.f32 %v511, %v588
        %v590 = vpop.f32.mrf.mxu0
        %591 = vmatprep.mubr.bf16.mxu0 0
        %592 = vmatmul.mubr.bf16.gmra.mxu0 %v546
        %v593 = vpop.f32.mrf.mxu0
        %v594 = vadd.f32 %v516, %v593
        %v595 = vpop.f32.mrf.mxu0
        %v596 = vpop.f32.mrf.mxu0
        %v597 = vadd.f32 %v521, %v596
        %v598 = vpop.f32.mrf.mxu0
        %599 = vmatprep.mubr.bf16.mxu0 0
        %600 = vmatmul.mubr.bf16.gmra.mxu0 %v549
        %v601 = vpop.f32.mrf.mxu0
        %v602 = vadd.f32 %v526, %v601
        %v603 = vpop.f32.mrf.mxu0
        %v604 = vpop.f32.mrf.mxu0
        %v605 = vpop.f32.mrf.mxu0
        %606 = vdwg.mxu0
        %v607 = vpack.c.bf16 %v586, %v586
        %v608 = vpack.c.bf16 %v594, %v589
        %v609 = vpack.c.bf16 %v602, %v597
        %v610 = vld [vmem:[#allocation5] sm:$0xf]
        %611 = vxpose.xlu0.c.b16.start [1/8] %v607, 128
        %612 = vxpose.xlu0.c.b16.cont [2/8] 0, 128
        %613 = vxpose.xlu0.c.b16.cont [3/8] 0, 128
        %614 = vxpose.xlu0.c.b16.cont [4/8] 0, 128
        %615 = vxpose.xlu0.c.b16.cont [5/8] 0, 128
        %616 = vxpose.xlu0.c.b16.cont [6/8] 0, 128
        %617 = vxpose.xlu0.c.b16.cont [7/8] 0, 128
        %618 = vxpose.xlu0.c.b16.end [8/8] 0, 128
        %v619 = vpop.trf.xlu0
        %v620 = vpop.trf.xlu0
        %v621 = vpop.trf.xlu0
        %v622 = vpop.trf.xlu0
        %v623 = vpop.trf.xlu0
        %v624 = vpop.trf.xlu0
        %v625 = vpop.trf.xlu0
        %v626 = vpop.trf.xlu0
        %vm627 = vcmask 64512
        %v629 = vsel %vm627, %v619, 0
        %v632 = vsel %vm627, %v620, 0
        %v635 = vsel %vm627, %v621, 0
        %v638 = vsel %vm627, %v622, 0
        %v641 = vsel %vm627, %v623, 0
        %v644 = vsel %vm627, %v624, 0
        %v647 = vsel %vm627, %v625, 0
        %v650 = vsel %vm627, %v626, 0
        %vm652 = vcmask 1043456
        %v654 = vsel %vm652, %v610, 0
        %656 = vmatprep.subr.bf16.mxu0 0
        %657 = vmatpush1.bf16.msra.mxu0 0
        %658 = vmatprep.subr.bf16.mxu0 0
        %659 = vmatpush1.bf16.msra.mxu0 0
        %660 = vmatprep.subr.bf16.mxu0 0
        %661 = vmatpush1.bf16.msra.mxu0 0
        %662 = vmatprep.subr.bf16.mxu0 0
        %663 = vmatpush1.bf16.msra.mxu0 0
        %664 = vmatprep.subr.bf16.mxu0 0
        %665 = vmatpush1.bf16.msra.mxu0 0
        %666 = vmatprep.subr.bf16.mxu0 0
        %667 = vmatpush1.bf16.msra.mxu0 0
        %668 = vmatprep.subr.bf16.mxu0 0
        %669 = vmatpush1.bf16.msra.mxu0 0
        %670 = vmatprep.subr.bf16.mxu0 0
        %671 = vmatpush1.bf16.msra.mxu0 %v654
        %672 = vmatprep.subr.bf16.mxu0 0
        %673 = vmatpush2.bf16.msra.mxu0 0
        %674 = vmatprep.subr.bf16.mxu0 0
        %675 = vmatpush2.bf16.msra.mxu0 0
        %676 = vmatprep.subr.bf16.mxu0 0
        %677 = vmatpush2.bf16.msra.mxu0 0
        %678 = vmatprep.subr.bf16.mxu0 0
        %679 = vmatpush2.bf16.msra.mxu0 0
        %680 = vmatprep.subr.bf16.mxu0 0
        %681 = vmatpush2.bf16.msra.mxu0 0
        %682 = vmatprep.subr.bf16.mxu0 0
        %683 = vmatpush2.bf16.msra.mxu0 0
        %684 = vmatprep.subr.bf16.mxu0 0
        %685 = vmatpush2.bf16.msra.mxu0 0
        %686 = vmatprep.subr.bf16.mxu0 0
        %687 = vmatpush2.bf16.msra.mxu0 0
        %688 = vmatprep.mubr.bf16.mxu0 0
        %689 = vmatmul.mubr.bf16.gmra.mxu0 %v629
        %v690 = vpop.f32.mrf.mxu0
        %v691 = vadd.f32 0.0, %v690
        %v692 = vpop.f32.mrf.mxu0
        %v693 = vpop.f32.mrf.mxu0
        %v694 = vadd.f32 0.0, %v693
        %v695 = vpop.f32.mrf.mxu0
        %696 = vmatprep.mubr.bf16.mxu0 0
        %697 = vmatmul.mubr.bf16.gmra.mxu0 %v632
        %v698 = vpop.f32.mrf.mxu0
        %v699 = vadd.f32 0.0, %v698
        %v700 = vpop.f32.mrf.mxu0
        %v701 = vpop.f32.mrf.mxu0
        %v702 = vadd.f32 0.0, %v701
        %v703 = vpop.f32.mrf.mxu0
        %704 = vmatprep.mubr.bf16.mxu0 0
        %705 = vmatmul.mubr.bf16.gmra.mxu0 %v635
        %v706 = vpop.f32.mrf.mxu0
        %v707 = vadd.f32 0.0, %v706
        %v708 = vpop.f32.mrf.mxu0
        %v709 = vpop.f32.mrf.mxu0
        %v710 = vadd.f32 0.0, %v709
        %v711 = vpop.f32.mrf.mxu0
        %712 = vmatprep.mubr.bf16.mxu0 0
        %713 = vmatmul.mubr.bf16.gmra.mxu0 %v638
        %v714 = vpop.f32.mrf.mxu0
        %v715 = vadd.f32 0.0, %v714
        %v716 = vpop.f32.mrf.mxu0
        %v717 = vpop.f32.mrf.mxu0
        %v718 = vadd.f32 0.0, %v717
        %v719 = vpop.f32.mrf.mxu0
        %720 = vmatprep.mubr.bf16.mxu0 0
        %721 = vmatmul.mubr.bf16.gmra.mxu0 %v641
        %v722 = vpop.f32.mrf.mxu0
        %v723 = vadd.f32 0.0, %v722
        %v724 = vpop.f32.mrf.mxu0
        %v725 = vpop.f32.mrf.mxu0
        %v726 = vadd.f32 0.0, %v725
        %v727 = vpop.f32.mrf.mxu0
        %728 = vmatprep.mubr.bf16.mxu0 0
        %729 = vmatmul.mubr.bf16.gmra.mxu0 %v644
        %v730 = vpop.f32.mrf.mxu0
        %v731 = vadd.f32 0.0, %v730
        %v732 = vpop.f32.mrf.mxu0
        %v733 = vpop.f32.mrf.mxu0
        %v734 = vadd.f32 0.0, %v733
        %v735 = vpop.f32.mrf.mxu0
        %736 = vmatprep.mubr.bf16.mxu0 0
        %737 = vmatmul.mubr.bf16.gmra.mxu0 %v647
        %v738 = vpop.f32.mrf.mxu0
        %v739 = vadd.f32 0.0, %v738
        %v740 = vpop.f32.mrf.mxu0
        %v741 = vpop.f32.mrf.mxu0
        %v742 = vadd.f32 0.0, %v741
        %v743 = vpop.f32.mrf.mxu0
        %744 = vmatprep.mubr.bf16.mxu0 0
        %745 = vmatmul.mubr.bf16.gmra.mxu0 %v650
        %v746 = vpop.f32.mrf.mxu0
        %v747 = vadd.f32 0.0, %v746
        %v748 = vpop.f32.mrf.mxu0
        %v749 = vpop.f32.mrf.mxu0
        %v750 = vadd.f32 0.0, %v749
        %v751 = vpop.f32.mrf.mxu0
        %752 = vdwg.mxu0
        %v753 = vld [vmem:[#allocation2] sm:$0x1]
        %v754 = vmax.f32 %v691, %v707
        %v755 = vmax.f32 %v694, %v710
        %v756 = vmax.f32 %v699, %v715
        %v757 = vmax.f32 %v702, %v718
        %v758 = vmax.f32 %v754, %v723
        %v759 = vmax.f32 %v755, %v726
        %v760 = vmax.f32 %v756, %v731
        %v761 = vmax.f32 %v757, %v734
        %v762 = vmax.f32 %v758, %v739
        %v763 = vmax.f32 %v759, %v742
        %v764 = vmax.f32 %v760, %v747
        %v765 = vmax.f32 %v761, %v750
        %v766 = vmax.f32 %v762, %v763
        %v767 = vmax.f32 %v764, %v765
        %v768 = vmax.f32 %v766, %v767
        %v769 = vrot.slane %v768, 4
        %v770 = vmax.f32 %v768, %v769
        %v771 = vrot.slane %v770, 2
        %v772 = vmax.f32 %v770, %v771
        %v773 = vrot.slane %v772, 1
        %v774 = vmax.f32 %v772, %v773
        %v775 = vmax.f32 %v753, %v774
        %v776 = vsub.f32 %v753, %v775
        %v777 = vmul.f32 %v776, 1.442695
        %v778 = vpow.pop %v777
        %v780 = vlaneseq
        %v781 = vshrl.u32 %v780, 7
        %v782 = vsub.s32 0, %v781
        %v783 = vrot.slane %v775, %v782
        %v785 = vsub.f32 %v691, %v783
        %v786 = vsub.f32 %v694, %v783
        %v787 = vsub.f32 %v699, %v783
        %v788 = vsub.f32 %v702, %v783
        %v789 = vsub.f32 %v707, %v783
        %v790 = vsub.f32 %v710, %v783
        %v791 = vsub.f32 %v715, %v783
        %v792 = vsub.f32 %v718, %v783
        %v793 = vsub.f32 %v723, %v783
        %v794 = vsub.f32 %v726, %v783
        %v795 = vsub.f32 %v731, %v783
        %v796 = vsub.f32 %v734, %v783
        %v797 = vsub.f32 %v739, %v783
        %v798 = vsub.f32 %v742, %v783
        %v799 = vsub.f32 %v747, %v783
        %v800 = vsub.f32 %v750, %v783
        %v801 = vmul.f32 %v785, 1.442695
        %v802 = vpow.pop %v801
        %v803 = vmul.f32 %v786, 1.442695
        %v804 = vpow.pop %v803
        %v805 = vmul.f32 %v787, 1.442695
        %v806 = vpow.pop %v805
        %v807 = vmul.f32 %v788, 1.442695
        %v808 = vpow.pop %v807
        %v809 = vmul.f32 %v789, 1.442695
        %v810 = vpow.pop %v809
        %v811 = vmul.f32 %v790, 1.442695
        %v812 = vpow.pop %v811
        %v813 = vmul.f32 %v791, 1.442695
        %v814 = vpow.pop %v813
        %v815 = vmul.f32 %v792, 1.442695
        %v816 = vpow.pop %v815
        %v817 = vmul.f32 %v793, 1.442695
        %v818 = vpow.pop %v817
        %v819 = vmul.f32 %v794, 1.442695
        %v820 = vpow.pop %v819
        %v821 = vmul.f32 %v795, 1.442695
        %v822 = vpow.pop %v821
        %v823 = vmul.f32 %v796, 1.442695
        %v824 = vpow.pop %v823
        %v825 = vmul.f32 %v797, 1.442695
        %v826 = vpow.pop %v825
        %v827 = vmul.f32 %v798, 1.442695
        %v828 = vpow.pop %v827
        %v829 = vmul.f32 %v799, 1.442695
        %v830 = vpow.pop %v829
        %v831 = vmul.f32 %v800, 1.442695
        %v832 = vpow.pop %v831
        %v833 = vld [vmem:[#allocation3] sm:$0x1]
        %v834 = vmul.f32 %v778, %v833
        %v835 = vadd.f32 %v802, %v804
        %v836 = vadd.f32 %v835, %v806
        %v837 = vadd.f32 %v836, %v808
        %v838 = vadd.f32 %v837, %v810
        %v839 = vadd.f32 %v838, %v812
        %v840 = vadd.f32 %v839, %v814
        %v841 = vadd.f32 %v840, %v816
        %v842 = vadd.f32 %v841, %v818
        %v843 = vadd.f32 %v842, %v820
        %v844 = vadd.f32 %v843, %v822
        %v845 = vadd.f32 %v844, %v824
        %v846 = vadd.f32 %v845, %v826
        %v847 = vadd.f32 %v846, %v828
        %v848 = vadd.f32 %v847, %v830
        %v849 = vadd.f32 %v848, %v832
        %v850 = vrot.slane %v849, 4
        %v851 = vadd.f32 %v849, %v850
        %v852 = vrot.slane %v851, 2
        %v853 = vadd.f32 %v851, %v852
        %v854 = vrot.slane %v853, 1
        %v855 = vadd.f32 %v853, %v854
        %v856 = vadd.f32 %v834, %v855
        %857 = vst [vmem:[#allocation3] sm:$0x1] %v856
        %v858 = vld [vmem:[#allocation4] sm:$0xff]
        %v859 = vld [vmem:[#allocation4 + $0x8] sm:$0xff]
        %v860 = vld [vmem:[#allocation4 + $0x10] sm:$0xff]
        %v861 = vld [vmem:[#allocation4 + $0x18] sm:$0xff]
        %v863 = vlaneseq
        %v864 = vshrl.u32 %v863, 7
        %v865 = vsub.s32 0, %v864
        %v866 = vrot.slane %v778, %v865
        %v868 = vmul.f32 %v866, %v858
        %v869 = vmul.f32 %v866, %v859
        %v870 = vmul.f32 %v866, %v860
        %v871 = vmul.f32 %v866, %v861
        %v872 = vpack.c.bf16 %v804, %v802
        %v873 = vpack.c.bf16 %v808, %v806
        %v874 = vpack.c.bf16 %v812, %v810
        %v875 = vpack.c.bf16 %v816, %v814
        %v876 = vpack.c.bf16 %v820, %v818
        %v877 = vpack.c.bf16 %v824, %v822
        %v878 = vpack.c.bf16 %v828, %v826
        %v879 = vpack.c.bf16 %v832, %v830
        %880 = vmatprep.subr.bf16.mxu0 0
        %881 = vmatpush1.bf16.msra.mxu0 %v879
        %882 = vmatprep.subr.bf16.mxu0 0
        %883 = vmatpush1.bf16.msra.mxu0 %v878
        %884 = vmatprep.subr.bf16.mxu0 0
        %885 = vmatpush1.bf16.msra.mxu0 %v877
        %886 = vmatprep.subr.bf16.mxu0 0
        %887 = vmatpush1.bf16.msra.mxu0 %v876
        %888 = vmatprep.subr.bf16.mxu0 0
        %889 = vmatpush1.bf16.msra.mxu0 %v875
        %890 = vmatprep.subr.bf16.mxu0 0
        %891 = vmatpush1.bf16.msra.mxu0 %v874
        %892 = vmatprep.subr.bf16.mxu0 0
        %893 = vmatpush1.bf16.msra.mxu0 %v873
        %894 = vmatprep.subr.bf16.mxu0 0
        %895 = vmatpush1.bf16.msra.mxu0 %v872
        %896 = vmatprep.subr.bf16.mxu0 0
        %897 = vmatpush2.bf16.msra.mxu0 0
        %898 = vmatprep.subr.bf16.mxu0 0
        %899 = vmatpush2.bf16.msra.mxu0 0
        %900 = vmatprep.subr.bf16.mxu0 0
        %901 = vmatpush2.bf16.msra.mxu0 0
        %902 = vmatprep.subr.bf16.mxu0 0
        %903 = vmatpush2.bf16.msra.mxu0 0
        %904 = vmatprep.subr.bf16.mxu0 0
        %905 = vmatpush2.bf16.msra.mxu0 0
        %906 = vmatprep.subr.bf16.mxu0 0
        %907 = vmatpush2.bf16.msra.mxu0 0
        %908 = vmatprep.subr.bf16.mxu0 0
        %909 = vmatpush2.bf16.msra.mxu0 0
        %910 = vmatprep.subr.bf16.mxu0 0
        %911 = vmatpush2.bf16.msra.mxu0 0
        %912 = vmatprep.mubr.bf16.mxu0 0
        %913 = vmatmul.mubr.bf16.gmra.mxu0 %v608
        %v914 = vpop.f32.mrf.mxu0
        %v915 = vadd.f32 0.0, %v914
        %v916 = vpop.f32.mrf.mxu0
        %v917 = vpop.f32.mrf.mxu0
        %v918 = vadd.f32 0.0, %v917
        %v919 = vpop.f32.mrf.mxu0
        %920 = vmatprep.mubr.bf16.mxu0 0
        %921 = vmatmul.mubr.bf16.gmra.mxu0 %v609
        %v922 = vpop.f32.mrf.mxu0
        %v923 = vadd.f32 0.0, %v922
        %v924 = vpop.f32.mrf.mxu0
        %v925 = vpop.f32.mrf.mxu0
        %v926 = vadd.f32 0.0, %v925
        %v927 = vpop.f32.mrf.mxu0
        %928 = vdwg.mxu0
        %v929 = vadd.f32 %v868, %v915
        %v930 = vadd.f32 %v869, %v918
        %v931 = vadd.f32 %v870, %v923
        %v932 = vadd.f32 %v871, %v926
        %933 = vst [vmem:[#allocation4] sm:$0xff] %v929
        %934 = vst [vmem:[#allocation4 + $0x8] sm:$0xff] %v930
        %935 = vst [vmem:[#allocation4 + $0x10] sm:$0xff] %v931
        %936 = vst [vmem:[#allocation4 + $0x18] sm:$0xff] %v932
        %937 = vst [vmem:[#allocation2] sm:$0x1] %v775
        %p938 = scmp.eq.s32.totalorder %s26, 1
        // Predicated region
        $region129: #{_lambda_.1} parent=115 // pred_check
          %p939 = pneg %p938
        $region130: #{_lambda_.1} parent=115 // pred_check_branch
          %941 = sbr.rel (%p939) target = $region132
        $region131: #{_lambda_.1} parent=115 // pred_region
          %v942 = vld [vmem:[#allocation4] sm:$0xff]
          %v943 = vld [vmem:[#allocation4 + $0x8] sm:$0xff]
          %v944 = vld [vmem:[#allocation4 + $0x10] sm:$0xff]
          %v945 = vld [vmem:[#allocation4 + $0x18] sm:$0xff]
          %v946 = vld [vmem:[#allocation3] sm:$0x1]
          %v947 = vrcp.pop %v946
          %v949 = vlaneseq
          %v950 = vshrl.u32 %v949, 7
          %v951 = vsub.s32 0, %v950
          %v952 = vrot.slane %v947, %v951
          %v954 = vmul.f32 %v942, %v952
          %v955 = vmul.f32 %v943, %v952
          %v956 = vmul.f32 %v944, %v952
          %v957 = vmul.f32 %v945, %v952
          %s958 = sld [smem:[#allocation6]]
          %v959 = vstv %s958
          %v960 = vmul.f32 %v959, %v954
          %v961 = vmul.f32 %v959, %v955
          %v962 = vmul.f32 %v959, %v956
          %v963 = vmul.f32 %v959, %v957
          %v964 = vld [vmem:[%s378] sm:$0xff]
          %v965 = vld [vmem:[%s378 + $0x8] sm:$0xff]
          %v966 = vld [vmem:[%s378 + $0x10] sm:$0xff]
          %v967 = vld [vmem:[%s378 + $0x18] sm:$0xff]
          %v968 = vadd.f32 %v960, %v964
          %v969 = vadd.f32 %v961, %v965
          %v970 = vadd.f32 %v962, %v966
          %v971 = vadd.f32 %v963, %v967
          %972 = vst [vmem:[%s416] sm:$0xff] %v968
          %973 = vst [vmem:[%s416 + $0x8] sm:$0xff] %v969
          %974 = vst [vmem:[%s416 + $0x10] sm:$0xff] %v970
          %975 = vst [vmem:[%s416 + $0x18] sm:$0xff] %v971
        $region132: #{_lambda_.1} parent=115 // pred_fallthru
          _
        %s976 = sand.u32 %s209, 1
        %s977 = sand.u32 %s209, 1
        %s978 = smul.addr %s977, 32
        %s979 = scalar_lea.vmem [#allocation9], %s978
        // Predicated region
        $region133: #{_lambda_.1} parent=115 // pred_check
          %p980 = pneg %p219
        $region134: #{_lambda_.1} parent=115 // pred_check_branch
          %982 = sbr.rel (%p980) target = $region136
        $region135: #{_lambda_.1} parent=115 // pred_region
          %s983 = smul.addr %s24, 8
          %s984 = sadd.s32 %s25, %s983
          %s985 = smul.addr %s984, 8
          %s986 = scalar_lea.vmem %s7, %s985
          // Predicated region
          $region137: #{_lambda_.1} parent=135 // pred_check
            _
          $region138: #{_lambda_.1} parent=135 // pred_check_branch
            %988 = sbr.rel (0) target = $region140
          $region139: #{_lambda_.1} parent=135 // pred_region
            // Predicated region
            $region141: #{_lambda_.1} parent=139 // pred_check
              _
            $region142: #{_lambda_.1} parent=139 // pred_check_branch
              %990 = sbr.rel (0) target = $region144
            $region143: #{_lambda_.1} parent=139 // pred_region
              // Predicated region
              $region156: #{_lambda_.1} parent=143 // pred_check
                _
              $region157: #{_lambda_.1} parent=143 // pred_check_branch
                %1012 = sbr.rel (0) target = $region159
              $region158: #{_lambda_.1} parent=143 // pred_region
                loop: start=0, step=1, limit=1
                $region160: #{_lambda_.1} parent=158 // loop_pre_header
                  _
                $region161: #{_lambda_.1} parent=158 // loop_header
                  %s1014 = sphi 0, %s1018
                  %p1015 = scmp.ge.s32.totalorder %s1014, 1
                  %s1019 = sphi %s979, %s979
                  %s1020 = sphi %s986, %s986
                $region162: #{_lambda_.1} parent=158 // loop_header_branch
                  %1017 = sbr.rel (%p1015) target = $region166
                $region163: #{_lambda_.1} parent=158 // loop_body
                  %v1021 = vld [vmem:[%s1019] sm:$0xff]
                  %1022 = vst [vmem:[%s1020] sm:$0xff] %v1021
                  %v1023 = vld [vmem:[%s1019 + $0x8] sm:$0xff]
                  %1024 = vst [vmem:[%s1020 + $0x10] sm:$0xff] %v1023
                  %v1025 = vld [vmem:[%s1019 + $0x10] sm:$0xff]
                  %1026 = vst [vmem:[%s1020 + $0x20] sm:$0xff] %v1025
                  %v1027 = vld [vmem:[%s1019 + $0x18] sm:$0xff]
                  %1028 = vst [vmem:[%s1020 + $0x30] sm:$0xff] %v1027
                $region164: #{_lambda_.1} parent=158 // loop_footer
                  %s1018 = sadd.s32 1, %s1014
                $region165: #{_lambda_.1} parent=158 // loop_footer_branch
                  %1013 = sbr.rel target = $region161
                $region166: #{_lambda_.1} parent=158 // loop_exit
                  _
              $region159: #{_lambda_.1} parent=143 // pred_fallthru
                _
              // Predicated region
              $region167: #{_lambda_.1} parent=143 // pred_check
                _
              $region168: #{_lambda_.1} parent=143 // pred_check_branch
                %1030 = sbr.rel target = $region170
              $region169: #{_lambda_.1} parent=143 // pred_region
                _
              $region170: #{_lambda_.1} parent=143 // pred_fallthru
                _
            $region144: #{_lambda_.1} parent=139 // pred_fallthru
              _
            // Predicated region
            $region145: #{_lambda_.1} parent=139 // pred_check
              _
            $region146: #{_lambda_.1} parent=139 // pred_check_branch
              %992 = sbr.rel target = $region148
            $region147: #{_lambda_.1} parent=139 // pred_region
              %s994 = ssub.s32 256, 1
              loop: start=0, step=1, limit=1
              $region149: #{_lambda_.1} parent=147 // loop_pre_header
                _
              $region150: #{_lambda_.1} parent=147 // loop_header
                %s996 = sphi 0, %s1000
                %p997 = scmp.ge.s32.totalorder %s996, 1
                %s1001 = sphi %s979, %s979
                %s1002 = sphi %s986, %s986
              $region151: #{_lambda_.1} parent=147 // loop_header_branch
                %999 = sbr.rel (%p997) target = $region155
              $region152: #{_lambda_.1} parent=147 // loop_body
                %v1003 = vld [vmem:[%s1001] sm:%s994]
                %1004 = vst [vmem:[%s1002] sm:%s994] %v1003
                %v1005 = vld [vmem:[%s1001 + $0x8] sm:%s994]
                %1006 = vst [vmem:[%s1002 + $0x10] sm:%s994] %v1005
                %v1007 = vld [vmem:[%s1001 + $0x10] sm:%s994]
                %1008 = vst [vmem:[%s1002 + $0x20] sm:%s994] %v1007
                %v1009 = vld [vmem:[%s1001 + $0x18] sm:%s994]
                %1010 = vst [vmem:[%s1002 + $0x30] sm:%s994] %v1009
              $region153: #{_lambda_.1} parent=147 // loop_footer
                %s1000 = sadd.s32 1, %s996
              $region154: #{_lambda_.1} parent=147 // loop_footer_branch
                %995 = sbr.rel target = $region150
              $region155: #{_lambda_.1} parent=147 // loop_exit
                _
            $region148: #{_lambda_.1} parent=139 // pred_fallthru
              _
          $region140: #{_lambda_.1} parent=135 // pred_fallthru
            _
          %1031 = vnop
        $region136: #{_lambda_.1} parent=115 // pred_fallthru
          _
      $region116: #{_lambda_.1} parent=5 // pred_fallthru
        _
      %p1032 = scmp.le.s32.totalorder 2, %s14
      // Predicated region
      $region171: #{_lambda_.1} parent=5 // pred_check
        %p1033 = pneg %p1032
      $region172: #{_lambda_.1} parent=5 // pred_check_branch
        %1035 = sbr.rel (%p1033) target = $region174
      $region173: #{_lambda_.1} parent=5 // pred_region
        %s1036 = ssub.s32 %s14, 2
        // Predicated region
        $region175: #{_lambda_.1} parent=173 // pred_check
          %p1037 = pneg %p225
        $region176: #{_lambda_.1} parent=173 // pred_check_branch
          %1039 = sbr.rel (%p1037) target = $region178
        $region177: #{_lambda_.1} parent=173 // pred_region
          %s1040 = sand.u32 %s210, 1
          %s1041 = sand.u32 %s210, 1
          %s1042 = smul.addr %s1041, 32
          %s1043 = scalar_lea.vmem [#allocation9], %s1042
        $region178: #{_lambda_.1} parent=173 // pred_fallthru
          _
      $region174: #{_lambda_.1} parent=5 // pred_fallthru
        _
    $region6: #{_lambda_.1} parent=1 // loop_footer
      %s18 = sadd.s32 1, %s14
    $region7: #{_lambda_.1} parent=1 // loop_footer_branch
      %13 = sbr.rel target = $region3
    $region8: #{_lambda_.1} parent=1 // loop_exit
      _

</llo_original>
